<compile_context>
chip_gen: v7x
topology: tpu7x:2x2x1
jax: 0.10.0
libtpu: 0.0.40
codegen_flags: <defaults>
</compile_context>

<pallas_src>
import jax
import jax.numpy as jnp
from jax.experimental import pallas as pl
from jax.experimental.pallas import tpu as pltpu

NODE_CTS = [3, 6, 4, 2, 1, 1]   # -> 5 Linear layers, each followed by Sigmoid
NUM_PARAMS = sum(NODE_CTS[i] * NODE_CTS[i + 1] + NODE_CTS[i + 1]
                 for i in range(len(NODE_CTS) - 1))   # 53 weights + 14 biases = 67


def mlp_kernel(x_ref, wb_ref, o_ref):
    """One batch tile.

    x_ref : (F0, TILE_N) f32 in VMEM  -- batch on the lane axis
    wb_ref: (NUM_PARAMS,) f32 in SMEM -- flattened [W0, b0, W1, b1, ...] scalars
    o_ref : (1, TILE_N)  f32 in VMEM  -- lane-dense output slab
    """
    x = x_ref[...]                                     # (F0, TILE_N)
    h = [x[k:k + 1, :] for k in range(NODE_CTS[0])]    # list of (1, TILE_N) rows
    off = 0
    for layer in range(len(NODE_CTS) - 1):             # unrolled at trace time
        fin, fout = NODE_CTS[layer], NODE_CTS[layer + 1]
        new_h = []
        for j in range(fout):
            # z_j = sum_k W[j, k] * h_k + b_j   (scalar-broadcast FMAs on the VPU)
            z = h[0] * wb_ref[off + j * fin]
            for k in range(1, fin):
                z = z + h[k] * wb_ref[off + j * fin + k]
            z = z + wb_ref[off + fout * fin + j]       # bias scalar from SMEM
            # sigmoid(z) = 0.5 * tanh(0.5 * z) + 0.5  -> single EUP op per element
            new_h.append(0.5 * jnp.tanh(0.5 * z) + 0.5)
        h = new_h
        off += fout * fin + fout
    o_ref[...] = h[0]                                  # (1, TILE_N), lane-dense store


def pack_params(params):
    """Flatten [(W(out,in), b(out,)), ...] (torch layout) into one f32 vector."""
    chunks = []
    for w, b in params:
        chunks.append(w.reshape(-1))   # row-major: W[j, k] at j*fin + k
        chunks.append(b.reshape(-1))
    return jnp.concatenate(chunks).astype(jnp.float32)


def linear_regression_forward(x, params, max_tile_n=4096):
    """x: (N, 3) float32; params: list of (W(out,in), b(out,)). Returns (N, 1)."""
    n = x.shape[0]
    f0 = NODE_CTS[0]
    wb = pack_params(params)

    # Batch goes on the lane axis; pad N to a multiple of the tile (>=128 lanes).
    n128 = ((n + 127) // 128) * 128
    tile_n = min(max_tile_n, n128)
    n_pad = ((n + tile_n - 1) // tile_n) * tile_n

    x_t = x.T.astype(jnp.float32)                      # (3, N): features x batch
    if n_pad != n:
        x_t = jnp.pad(x_t, ((0, 0), (0, n_pad - n)))

    out = pl.pallas_call(
        mlp_kernel,
        out_shape=jax.ShapeDtypeStruct((1, n_pad), jnp.float32),
        grid=(n_pad // tile_n,),
        in_specs=[
            pl.BlockSpec((f0, tile_n), lambda i: (0, i)),        # x tile -> VMEM
            pl.BlockSpec(memory_space=pltpu.MemorySpace.SMEM),   # all 67 scalars
        ],
        out_specs=pl.BlockSpec((1, tile_n), lambda i: (0, i)),   # lane-dense output
        compiler_params=pltpu.CompilerParams(
            dimension_semantics=("parallel",)),                  # v7x megacore split
    )(x_t, wb)
    return out[:, :n].T                                          # back to (N, 1)


def init_params(key):
    """Deterministic init mimicking torch.nn.Linear: W (out, in), b (out,)."""
    params = []
    for i in range(len(NODE_CTS) - 1):
        fan_in, fan_out = NODE_CTS[i], NODE_CTS[i + 1]
        key, kw, kb = jax.random.split(key, 3)
        bound = 1.0 / (fan_in ** 0.5)
        w = jax.random.uniform(kw, (fan_out, fan_in), jnp.float32, -bound, bound)
        b = jax.random.uniform(kb, (fan_out,), jnp.float32, -bound, bound)
        params.append((w, b))
    return params


def reference_forward(x, params):
    h = x
    for w, b in params:                 # torch semantics: x @ W.T + b, sigmoid
        h = jax.nn.sigmoid(h @ w.T + b)
    return h


if __name__ == "__main__":
    key = jax.random.PRNGKey(0)
    key, kx = jax.random.split(key)

    batch = 8
    x = jax.random.normal(kx, (batch, NODE_CTS[0]), jnp.float32)
    params = init_params(key)

    y = linear_regression_forward(x, params)
    jax.block_until_ready(y)

    y_ref = reference_forward(x, params)
    assert y.shape == (batch, 1)
    assert jnp.allclose(y, y_ref, atol=1e-5, rtol=1e-5)

    print("KERNEL_OK")
</pallas_src>

<mosaic_0001>
module attributes {stable_mosaic.version = 11 : i64} {
  func.func @mlp_kernel(%arg0: i32, %arg1: memref<3x128xf32, #tpu.memory_space<vmem>>, %arg2: memref<67xf32, #tpu.memory_space<smem>>, %arg3: memref<1x128xf32, #tpu.memory_space<vmem>>) attributes {dimension_semantics = [#tpu.dimension_semantics<parallel>], iteration_bounds = array<i64: 1>, scalar_prefetch = 0 : i64, scratch_operands = 0 : i64, tpu.core_type = #tpu.core_type<tc>, window_params = [{transform_indices = @transform_0, window_bounds = array<i64: 3, 128>}, {transform_indices = @transform_1, window_bounds = array<i64: 67>}, {transform_indices = @transform_2, window_bounds = array<i64: 1, 128>}]} {
    %c0 = arith.constant 0 : index
    %c0_0 = arith.constant 0 : index
    %0 = vector.load %arg1[%c0, %c0_0] : memref<3x128xf32, #tpu.memory_space<vmem>>, vector<3x128xf32>
    %1 = vector.extract_strided_slice %0 {offsets = [0, 0], sizes = [1, 128], strides = [1, 1]} : vector<3x128xf32> to vector<1x128xf32>
    %2 = vector.extract_strided_slice %0 {offsets = [1, 0], sizes = [1, 128], strides = [1, 1]} : vector<3x128xf32> to vector<1x128xf32>
    %3 = vector.extract_strided_slice %0 {offsets = [2, 0], sizes = [1, 128], strides = [1, 1]} : vector<3x128xf32> to vector<1x128xf32>
    %c0_1 = arith.constant 0 : index
    %4 = memref.load %arg2[%c0_1] : memref<67xf32, #tpu.memory_space<smem>>
    %5 = vector.broadcast %4 : f32 to vector<1x128xf32>
    %6 = arith.mulf %1, %5 : vector<1x128xf32>
    %c1 = arith.constant 1 : index
    %7 = memref.load %arg2[%c1] : memref<67xf32, #tpu.memory_space<smem>>
    %8 = vector.broadcast %7 : f32 to vector<1x128xf32>
    %9 = arith.mulf %2, %8 : vector<1x128xf32>
    %10 = arith.addf %6, %9 : vector<1x128xf32>
    %c2 = arith.constant 2 : index
    %11 = memref.load %arg2[%c2] : memref<67xf32, #tpu.memory_space<smem>>
    %12 = vector.broadcast %11 : f32 to vector<1x128xf32>
    %13 = arith.mulf %3, %12 : vector<1x128xf32>
    %14 = arith.addf %10, %13 : vector<1x128xf32>
    %c18 = arith.constant 18 : index
    %15 = memref.load %arg2[%c18] : memref<67xf32, #tpu.memory_space<smem>>
    %16 = vector.broadcast %15 : f32 to vector<1x128xf32>
    %17 = arith.addf %14, %16 : vector<1x128xf32>
    %cst = arith.constant 5.000000e-01 : f32
    %18 = vector.broadcast %cst : f32 to vector<1x128xf32>
    %19 = arith.mulf %18, %17 : vector<1x128xf32>
    %20 = math.tanh %19 : vector<1x128xf32>
    %cst_2 = arith.constant 5.000000e-01 : f32
    %21 = vector.broadcast %cst_2 : f32 to vector<1x128xf32>
    %22 = arith.mulf %21, %20 : vector<1x128xf32>
    %cst_3 = arith.constant 5.000000e-01 : f32
    %23 = vector.broadcast %cst_3 : f32 to vector<1x128xf32>
    %24 = arith.addf %22, %23 : vector<1x128xf32>
    %c3 = arith.constant 3 : index
    %25 = memref.load %arg2[%c3] : memref<67xf32, #tpu.memory_space<smem>>
    %26 = vector.broadcast %25 : f32 to vector<1x128xf32>
    %27 = arith.mulf %1, %26 : vector<1x128xf32>
    %c4 = arith.constant 4 : index
    %28 = memref.load %arg2[%c4] : memref<67xf32, #tpu.memory_space<smem>>
    %29 = vector.broadcast %28 : f32 to vector<1x128xf32>
    %30 = arith.mulf %2, %29 : vector<1x128xf32>
    %31 = arith.addf %27, %30 : vector<1x128xf32>
    %c5 = arith.constant 5 : index
    %32 = memref.load %arg2[%c5] : memref<67xf32, #tpu.memory_space<smem>>
    %33 = vector.broadcast %32 : f32 to vector<1x128xf32>
    %34 = arith.mulf %3, %33 : vector<1x128xf32>
    %35 = arith.addf %31, %34 : vector<1x128xf32>
    %c19 = arith.constant 19 : index
    %36 = memref.load %arg2[%c19] : memref<67xf32, #tpu.memory_space<smem>>
    %37 = vector.broadcast %36 : f32 to vector<1x128xf32>
    %38 = arith.addf %35, %37 : vector<1x128xf32>
    %cst_4 = arith.constant 5.000000e-01 : f32
    %39 = vector.broadcast %cst_4 : f32 to vector<1x128xf32>
    %40 = arith.mulf %39, %38 : vector<1x128xf32>
    %41 = math.tanh %40 : vector<1x128xf32>
    %cst_5 = arith.constant 5.000000e-01 : f32
    %42 = vector.broadcast %cst_5 : f32 to vector<1x128xf32>
    %43 = arith.mulf %42, %41 : vector<1x128xf32>
    %cst_6 = arith.constant 5.000000e-01 : f32
    %44 = vector.broadcast %cst_6 : f32 to vector<1x128xf32>
    %45 = arith.addf %43, %44 : vector<1x128xf32>
    %c6 = arith.constant 6 : index
    %46 = memref.load %arg2[%c6] : memref<67xf32, #tpu.memory_space<smem>>
    %47 = vector.broadcast %46 : f32 to vector<1x128xf32>
    %48 = arith.mulf %1, %47 : vector<1x128xf32>
    %c7 = arith.constant 7 : index
    %49 = memref.load %arg2[%c7] : memref<67xf32, #tpu.memory_space<smem>>
    %50 = vector.broadcast %49 : f32 to vector<1x128xf32>
    %51 = arith.mulf %2, %50 : vector<1x128xf32>
    %52 = arith.addf %48, %51 : vector<1x128xf32>
    %c8 = arith.constant 8 : index
    %53 = memref.load %arg2[%c8] : memref<67xf32, #tpu.memory_space<smem>>
    %54 = vector.broadcast %53 : f32 to vector<1x128xf32>
    %55 = arith.mulf %3, %54 : vector<1x128xf32>
    %56 = arith.addf %52, %55 : vector<1x128xf32>
    %c20 = arith.constant 20 : index
    %57 = memref.load %arg2[%c20] : memref<67xf32, #tpu.memory_space<smem>>
    %58 = vector.broadcast %57 : f32 to vector<1x128xf32>
    %59 = arith.addf %56, %58 : vector<1x128xf32>
    %cst_7 = arith.constant 5.000000e-01 : f32
    %60 = vector.broadcast %cst_7 : f32 to vector<1x128xf32>
    %61 = arith.mulf %60, %59 : vector<1x128xf32>
    %62 = math.tanh %61 : vector<1x128xf32>
    %cst_8 = arith.constant 5.000000e-01 : f32
    %63 = vector.broadcast %cst_8 : f32 to vector<1x128xf32>
    %64 = arith.mulf %63, %62 : vector<1x128xf32>
    %cst_9 = arith.constant 5.000000e-01 : f32
    %65 = vector.broadcast %cst_9 : f32 to vector<1x128xf32>
    %66 = arith.addf %64, %65 : vector<1x128xf32>
    %c9 = arith.constant 9 : index
    %67 = memref.load %arg2[%c9] : memref<67xf32, #tpu.memory_space<smem>>
    %68 = vector.broadcast %67 : f32 to vector<1x128xf32>
    %69 = arith.mulf %1, %68 : vector<1x128xf32>
    %c10 = arith.constant 10 : index
    %70 = memref.load %arg2[%c10] : memref<67xf32, #tpu.memory_space<smem>>
    %71 = vector.broadcast %70 : f32 to vector<1x128xf32>
    %72 = arith.mulf %2, %71 : vector<1x128xf32>
    %73 = arith.addf %69, %72 : vector<1x128xf32>
    %c11 = arith.constant 11 : index
    %74 = memref.load %arg2[%c11] : memref<67xf32, #tpu.memory_space<smem>>
    %75 = vector.broadcast %74 : f32 to vector<1x128xf32>
    %76 = arith.mulf %3, %75 : vector<1x128xf32>
    %77 = arith.addf %73, %76 : vector<1x128xf32>
    %c21 = arith.constant 21 : index
    %78 = memref.load %arg2[%c21] : memref<67xf32, #tpu.memory_space<smem>>
    %79 = vector.broadcast %78 : f32 to vector<1x128xf32>
    %80 = arith.addf %77, %79 : vector<1x128xf32>
    %cst_10 = arith.constant 5.000000e-01 : f32
    %81 = vector.broadcast %cst_10 : f32 to vector<1x128xf32>
    %82 = arith.mulf %81, %80 : vector<1x128xf32>
    %83 = math.tanh %82 : vector<1x128xf32>
    %cst_11 = arith.constant 5.000000e-01 : f32
    %84 = vector.broadcast %cst_11 : f32 to vector<1x128xf32>
    %85 = arith.mulf %84, %83 : vector<1x128xf32>
    %cst_12 = arith.constant 5.000000e-01 : f32
    %86 = vector.broadcast %cst_12 : f32 to vector<1x128xf32>
    %87 = arith.addf %85, %86 : vector<1x128xf32>
    %c12 = arith.constant 12 : index
    %88 = memref.load %arg2[%c12] : memref<67xf32, #tpu.memory_space<smem>>
    %89 = vector.broadcast %88 : f32 to vector<1x128xf32>
    %90 = arith.mulf %1, %89 : vector<1x128xf32>
    %c13 = arith.constant 13 : index
    %91 = memref.load %arg2[%c13] : memref<67xf32, #tpu.memory_space<smem>>
    %92 = vector.broadcast %91 : f32 to vector<1x128xf32>
    %93 = arith.mulf %2, %92 : vector<1x128xf32>
    %94 = arith.addf %90, %93 : vector<1x128xf32>
    %c14 = arith.constant 14 : index
    %95 = memref.load %arg2[%c14] : memref<67xf32, #tpu.memory_space<smem>>
    %96 = vector.broadcast %95 : f32 to vector<1x128xf32>
    %97 = arith.mulf %3, %96 : vector<1x128xf32>
    %98 = arith.addf %94, %97 : vector<1x128xf32>
    %c22 = arith.constant 22 : index
    %99 = memref.load %arg2[%c22] : memref<67xf32, #tpu.memory_space<smem>>
    %100 = vector.broadcast %99 : f32 to vector<1x128xf32>
    %101 = arith.addf %98, %100 : vector<1x128xf32>
    %cst_13 = arith.constant 5.000000e-01 : f32
    %102 = vector.broadcast %cst_13 : f32 to vector<1x128xf32>
    %103 = arith.mulf %102, %101 : vector<1x128xf32>
    %104 = math.tanh %103 : vector<1x128xf32>
    %cst_14 = arith.constant 5.000000e-01 : f32
    %105 = vector.broadcast %cst_14 : f32 to vector<1x128xf32>
    %106 = arith.mulf %105, %104 : vector<1x128xf32>
    %cst_15 = arith.constant 5.000000e-01 : f32
    %107 = vector.broadcast %cst_15 : f32 to vector<1x128xf32>
    %108 = arith.addf %106, %107 : vector<1x128xf32>
    %c15 = arith.constant 15 : index
    %109 = memref.load %arg2[%c15] : memref<67xf32, #tpu.memory_space<smem>>
    %110 = vector.broadcast %109 : f32 to vector<1x128xf32>
    %111 = arith.mulf %1, %110 : vector<1x128xf32>
    %c16 = arith.constant 16 : index
    %112 = memref.load %arg2[%c16] : memref<67xf32, #tpu.memory_space<smem>>
    %113 = vector.broadcast %112 : f32 to vector<1x128xf32>
    %114 = arith.mulf %2, %113 : vector<1x128xf32>
    %115 = arith.addf %111, %114 : vector<1x128xf32>
    %c17 = arith.constant 17 : index
    %116 = memref.load %arg2[%c17] : memref<67xf32, #tpu.memory_space<smem>>
    %117 = vector.broadcast %116 : f32 to vector<1x128xf32>
    %118 = arith.mulf %3, %117 : vector<1x128xf32>
    %119 = arith.addf %115, %118 : vector<1x128xf32>
    %c23 = arith.constant 23 : index
    %120 = memref.load %arg2[%c23] : memref<67xf32, #tpu.memory_space<smem>>
    %121 = vector.broadcast %120 : f32 to vector<1x128xf32>
    %122 = arith.addf %119, %121 : vector<1x128xf32>
    %cst_16 = arith.constant 5.000000e-01 : f32
    %123 = vector.broadcast %cst_16 : f32 to vector<1x128xf32>
    %124 = arith.mulf %123, %122 : vector<1x128xf32>
    %125 = math.tanh %124 : vector<1x128xf32>
    %cst_17 = arith.constant 5.000000e-01 : f32
    %126 = vector.broadcast %cst_17 : f32 to vector<1x128xf32>
    %127 = arith.mulf %126, %125 : vector<1x128xf32>
    %cst_18 = arith.constant 5.000000e-01 : f32
    %128 = vector.broadcast %cst_18 : f32 to vector<1x128xf32>
    %129 = arith.addf %127, %128 : vector<1x128xf32>
    %c24 = arith.constant 24 : index
    %130 = memref.load %arg2[%c24] : memref<67xf32, #tpu.memory_space<smem>>
    %131 = vector.broadcast %130 : f32 to vector<1x128xf32>
    %132 = arith.mulf %24, %131 : vector<1x128xf32>
    %c25 = arith.constant 25 : index
    %133 = memref.load %arg2[%c25] : memref<67xf32, #tpu.memory_space<smem>>
    %134 = vector.broadcast %133 : f32 to vector<1x128xf32>
    %135 = arith.mulf %45, %134 : vector<1x128xf32>
    %136 = arith.addf %132, %135 : vector<1x128xf32>
    %c26 = arith.constant 26 : index
    %137 = memref.load %arg2[%c26] : memref<67xf32, #tpu.memory_space<smem>>
    %138 = vector.broadcast %137 : f32 to vector<1x128xf32>
    %139 = arith.mulf %66, %138 : vector<1x128xf32>
    %140 = arith.addf %136, %139 : vector<1x128xf32>
    %c27 = arith.constant 27 : index
    %141 = memref.load %arg2[%c27] : memref<67xf32, #tpu.memory_space<smem>>
    %142 = vector.broadcast %141 : f32 to vector<1x128xf32>
    %143 = arith.mulf %87, %142 : vector<1x128xf32>
    %144 = arith.addf %140, %143 : vector<1x128xf32>
    %c28 = arith.constant 28 : index
    %145 = memref.load %arg2[%c28] : memref<67xf32, #tpu.memory_space<smem>>
    %146 = vector.broadcast %145 : f32 to vector<1x128xf32>
    %147 = arith.mulf %108, %146 : vector<1x128xf32>
    %148 = arith.addf %144, %147 : vector<1x128xf32>
    %c29 = arith.constant 29 : index
    %149 = memref.load %arg2[%c29] : memref<67xf32, #tpu.memory_space<smem>>
    %150 = vector.broadcast %149 : f32 to vector<1x128xf32>
    %151 = arith.mulf %129, %150 : vector<1x128xf32>
    %152 = arith.addf %148, %151 : vector<1x128xf32>
    %c48 = arith.constant 48 : index
    %153 = memref.load %arg2[%c48] : memref<67xf32, #tpu.memory_space<smem>>
    %154 = vector.broadcast %153 : f32 to vector<1x128xf32>
    %155 = arith.addf %152, %154 : vector<1x128xf32>
    %cst_19 = arith.constant 5.000000e-01 : f32
    %156 = vector.broadcast %cst_19 : f32 to vector<1x128xf32>
    %157 = arith.mulf %156, %155 : vector<1x128xf32>
    %158 = math.tanh %157 : vector<1x128xf32>
    %cst_20 = arith.constant 5.000000e-01 : f32
    %159 = vector.broadcast %cst_20 : f32 to vector<1x128xf32>
    %160 = arith.mulf %159, %158 : vector<1x128xf32>
    %cst_21 = arith.constant 5.000000e-01 : f32
    %161 = vector.broadcast %cst_21 : f32 to vector<1x128xf32>
    %162 = arith.addf %160, %161 : vector<1x128xf32>
    %c30 = arith.constant 30 : index
    %163 = memref.load %arg2[%c30] : memref<67xf32, #tpu.memory_space<smem>>
    %164 = vector.broadcast %163 : f32 to vector<1x128xf32>
    %165 = arith.mulf %24, %164 : vector<1x128xf32>
    %c31 = arith.constant 31 : index
    %166 = memref.load %arg2[%c31] : memref<67xf32, #tpu.memory_space<smem>>
    %167 = vector.broadcast %166 : f32 to vector<1x128xf32>
    %168 = arith.mulf %45, %167 : vector<1x128xf32>
    %169 = arith.addf %165, %168 : vector<1x128xf32>
    %c32 = arith.constant 32 : index
    %170 = memref.load %arg2[%c32] : memref<67xf32, #tpu.memory_space<smem>>
    %171 = vector.broadcast %170 : f32 to vector<1x128xf32>
    %172 = arith.mulf %66, %171 : vector<1x128xf32>
    %173 = arith.addf %169, %172 : vector<1x128xf32>
    %c33 = arith.constant 33 : index
    %174 = memref.load %arg2[%c33] : memref<67xf32, #tpu.memory_space<smem>>
    %175 = vector.broadcast %174 : f32 to vector<1x128xf32>
    %176 = arith.mulf %87, %175 : vector<1x128xf32>
    %177 = arith.addf %173, %176 : vector<1x128xf32>
    %c34 = arith.constant 34 : index
    %178 = memref.load %arg2[%c34] : memref<67xf32, #tpu.memory_space<smem>>
    %179 = vector.broadcast %178 : f32 to vector<1x128xf32>
    %180 = arith.mulf %108, %179 : vector<1x128xf32>
    %181 = arith.addf %177, %180 : vector<1x128xf32>
    %c35 = arith.constant 35 : index
    %182 = memref.load %arg2[%c35] : memref<67xf32, #tpu.memory_space<smem>>
    %183 = vector.broadcast %182 : f32 to vector<1x128xf32>
    %184 = arith.mulf %129, %183 : vector<1x128xf32>
    %185 = arith.addf %181, %184 : vector<1x128xf32>
    %c49 = arith.constant 49 : index
    %186 = memref.load %arg2[%c49] : memref<67xf32, #tpu.memory_space<smem>>
    %187 = vector.broadcast %186 : f32 to vector<1x128xf32>
    %188 = arith.addf %185, %187 : vector<1x128xf32>
    %cst_22 = arith.constant 5.000000e-01 : f32
    %189 = vector.broadcast %cst_22 : f32 to vector<1x128xf32>
    %190 = arith.mulf %189, %188 : vector<1x128xf32>
    %191 = math.tanh %190 : vector<1x128xf32>
    %cst_23 = arith.constant 5.000000e-01 : f32
    %192 = vector.broadcast %cst_23 : f32 to vector<1x128xf32>
    %193 = arith.mulf %192, %191 : vector<1x128xf32>
    %cst_24 = arith.constant 5.000000e-01 : f32
    %194 = vector.broadcast %cst_24 : f32 to vector<1x128xf32>
    %195 = arith.addf %193, %194 : vector<1x128xf32>
    %c36 = arith.constant 36 : index
    %196 = memref.load %arg2[%c36] : memref<67xf32, #tpu.memory_space<smem>>
    %197 = vector.broadcast %196 : f32 to vector<1x128xf32>
    %198 = arith.mulf %24, %197 : vector<1x128xf32>
    %c37 = arith.constant 37 : index
    %199 = memref.load %arg2[%c37] : memref<67xf32, #tpu.memory_space<smem>>
    %200 = vector.broadcast %199 : f32 to vector<1x128xf32>
    %201 = arith.mulf %45, %200 : vector<1x128xf32>
    %202 = arith.addf %198, %201 : vector<1x128xf32>
    %c38 = arith.constant 38 : index
    %203 = memref.load %arg2[%c38] : memref<67xf32, #tpu.memory_space<smem>>
    %204 = vector.broadcast %203 : f32 to vector<1x128xf32>
    %205 = arith.mulf %66, %204 : vector<1x128xf32>
    %206 = arith.addf %202, %205 : vector<1x128xf32>
    %c39 = arith.constant 39 : index
    %207 = memref.load %arg2[%c39] : memref<67xf32, #tpu.memory_space<smem>>
    %208 = vector.broadcast %207 : f32 to vector<1x128xf32>
    %209 = arith.mulf %87, %208 : vector<1x128xf32>
    %210 = arith.addf %206, %209 : vector<1x128xf32>
    %c40 = arith.constant 40 : index
    %211 = memref.load %arg2[%c40] : memref<67xf32, #tpu.memory_space<smem>>
    %212 = vector.broadcast %211 : f32 to vector<1x128xf32>
    %213 = arith.mulf %108, %212 : vector<1x128xf32>
    %214 = arith.addf %210, %213 : vector<1x128xf32>
    %c41 = arith.constant 41 : index
    %215 = memref.load %arg2[%c41] : memref<67xf32, #tpu.memory_space<smem>>
    %216 = vector.broadcast %215 : f32 to vector<1x128xf32>
    %217 = arith.mulf %129, %216 : vector<1x128xf32>
    %218 = arith.addf %214, %217 : vector<1x128xf32>
    %c50 = arith.constant 50 : index
    %219 = memref.load %arg2[%c50] : memref<67xf32, #tpu.memory_space<smem>>
    %220 = vector.broadcast %219 : f32 to vector<1x128xf32>
    %221 = arith.addf %218, %220 : vector<1x128xf32>
    %cst_25 = arith.constant 5.000000e-01 : f32
    %222 = vector.broadcast %cst_25 : f32 to vector<1x128xf32>
    %223 = arith.mulf %222, %221 : vector<1x128xf32>
    %224 = math.tanh %223 : vector<1x128xf32>
    %cst_26 = arith.constant 5.000000e-01 : f32
    %225 = vector.broadcast %cst_26 : f32 to vector<1x128xf32>
    %226 = arith.mulf %225, %224 : vector<1x128xf32>
    %cst_27 = arith.constant 5.000000e-01 : f32
    %227 = vector.broadcast %cst_27 : f32 to vector<1x128xf32>
    %228 = arith.addf %226, %227 : vector<1x128xf32>
    %c42 = arith.constant 42 : index
    %229 = memref.load %arg2[%c42] : memref<67xf32, #tpu.memory_space<smem>>
    %230 = vector.broadcast %229 : f32 to vector<1x128xf32>
    %231 = arith.mulf %24, %230 : vector<1x128xf32>
    %c43 = arith.constant 43 : index
    %232 = memref.load %arg2[%c43] : memref<67xf32, #tpu.memory_space<smem>>
    %233 = vector.broadcast %232 : f32 to vector<1x128xf32>
    %234 = arith.mulf %45, %233 : vector<1x128xf32>
    %235 = arith.addf %231, %234 : vector<1x128xf32>
    %c44 = arith.constant 44 : index
    %236 = memref.load %arg2[%c44] : memref<67xf32, #tpu.memory_space<smem>>
    %237 = vector.broadcast %236 : f32 to vector<1x128xf32>
    %238 = arith.mulf %66, %237 : vector<1x128xf32>
    %239 = arith.addf %235, %238 : vector<1x128xf32>
    %c45 = arith.constant 45 : index
    %240 = memref.load %arg2[%c45] : memref<67xf32, #tpu.memory_space<smem>>
    %241 = vector.broadcast %240 : f32 to vector<1x128xf32>
    %242 = arith.mulf %87, %241 : vector<1x128xf32>
    %243 = arith.addf %239, %242 : vector<1x128xf32>
    %c46 = arith.constant 46 : index
    %244 = memref.load %arg2[%c46] : memref<67xf32, #tpu.memory_space<smem>>
    %245 = vector.broadcast %244 : f32 to vector<1x128xf32>
    %246 = arith.mulf %108, %245 : vector<1x128xf32>
    %247 = arith.addf %243, %246 : vector<1x128xf32>
    %c47 = arith.constant 47 : index
    %248 = memref.load %arg2[%c47] : memref<67xf32, #tpu.memory_space<smem>>
    %249 = vector.broadcast %248 : f32 to vector<1x128xf32>
    %250 = arith.mulf %129, %249 : vector<1x128xf32>
    %251 = arith.addf %247, %250 : vector<1x128xf32>
    %c51 = arith.constant 51 : index
    %252 = memref.load %arg2[%c51] : memref<67xf32, #tpu.memory_space<smem>>
    %253 = vector.broadcast %252 : f32 to vector<1x128xf32>
    %254 = arith.addf %251, %253 : vector<1x128xf32>
    %cst_28 = arith.constant 5.000000e-01 : f32
    %255 = vector.broadcast %cst_28 : f32 to vector<1x128xf32>
    %256 = arith.mulf %255, %254 : vector<1x128xf32>
    %257 = math.tanh %256 : vector<1x128xf32>
    %cst_29 = arith.constant 5.000000e-01 : f32
    %258 = vector.broadcast %cst_29 : f32 to vector<1x128xf32>
    %259 = arith.mulf %258, %257 : vector<1x128xf32>
    %cst_30 = arith.constant 5.000000e-01 : f32
    %260 = vector.broadcast %cst_30 : f32 to vector<1x128xf32>
    %261 = arith.addf %259, %260 : vector<1x128xf32>
    %c52 = arith.constant 52 : index
    %262 = memref.load %arg2[%c52] : memref<67xf32, #tpu.memory_space<smem>>
    %263 = vector.broadcast %262 : f32 to vector<1x128xf32>
    %264 = arith.mulf %162, %263 : vector<1x128xf32>
    %c53 = arith.constant 53 : index
    %265 = memref.load %arg2[%c53] : memref<67xf32, #tpu.memory_space<smem>>
    %266 = vector.broadcast %265 : f32 to vector<1x128xf32>
    %267 = arith.mulf %195, %266 : vector<1x128xf32>
    %268 = arith.addf %264, %267 : vector<1x128xf32>
    %c54 = arith.constant 54 : index
    %269 = memref.load %arg2[%c54] : memref<67xf32, #tpu.memory_space<smem>>
    %270 = vector.broadcast %269 : f32 to vector<1x128xf32>
    %271 = arith.mulf %228, %270 : vector<1x128xf32>
    %272 = arith.addf %268, %271 : vector<1x128xf32>
    %c55 = arith.constant 55 : index
    %273 = memref.load %arg2[%c55] : memref<67xf32, #tpu.memory_space<smem>>
    %274 = vector.broadcast %273 : f32 to vector<1x128xf32>
    %275 = arith.mulf %261, %274 : vector<1x128xf32>
    %276 = arith.addf %272, %275 : vector<1x128xf32>
    %c60 = arith.constant 60 : index
    %277 = memref.load %arg2[%c60] : memref<67xf32, #tpu.memory_space<smem>>
    %278 = vector.broadcast %277 : f32 to vector<1x128xf32>
    %279 = arith.addf %276, %278 : vector<1x128xf32>
    %cst_31 = arith.constant 5.000000e-01 : f32
    %280 = vector.broadcast %cst_31 : f32 to vector<1x128xf32>
    %281 = arith.mulf %280, %279 : vector<1x128xf32>
    %282 = math.tanh %281 : vector<1x128xf32>
    %cst_32 = arith.constant 5.000000e-01 : f32
    %283 = vector.broadcast %cst_32 : f32 to vector<1x128xf32>
    %284 = arith.mulf %283, %282 : vector<1x128xf32>
    %cst_33 = arith.constant 5.000000e-01 : f32
    %285 = vector.broadcast %cst_33 : f32 to vector<1x128xf32>
    %286 = arith.addf %284, %285 : vector<1x128xf32>
    %c56 = arith.constant 56 : index
    %287 = memref.load %arg2[%c56] : memref<67xf32, #tpu.memory_space<smem>>
    %288 = vector.broadcast %287 : f32 to vector<1x128xf32>
    %289 = arith.mulf %162, %288 : vector<1x128xf32>
    %c57 = arith.constant 57 : index
    %290 = memref.load %arg2[%c57] : memref<67xf32, #tpu.memory_space<smem>>
    %291 = vector.broadcast %290 : f32 to vector<1x128xf32>
    %292 = arith.mulf %195, %291 : vector<1x128xf32>
    %293 = arith.addf %289, %292 : vector<1x128xf32>
    %c58 = arith.constant 58 : index
    %294 = memref.load %arg2[%c58] : memref<67xf32, #tpu.memory_space<smem>>
    %295 = vector.broadcast %294 : f32 to vector<1x128xf32>
    %296 = arith.mulf %228, %295 : vector<1x128xf32>
    %297 = arith.addf %293, %296 : vector<1x128xf32>
    %c59 = arith.constant 59 : index
    %298 = memref.load %arg2[%c59] : memref<67xf32, #tpu.memory_space<smem>>
    %299 = vector.broadcast %298 : f32 to vector<1x128xf32>
    %300 = arith.mulf %261, %299 : vector<1x128xf32>
    %301 = arith.addf %297, %300 : vector<1x128xf32>
    %c61 = arith.constant 61 : index
    %302 = memref.load %arg2[%c61] : memref<67xf32, #tpu.memory_space<smem>>
    %303 = vector.broadcast %302 : f32 to vector<1x128xf32>
    %304 = arith.addf %301, %303 : vector<1x128xf32>
    %cst_34 = arith.constant 5.000000e-01 : f32
    %305 = vector.broadcast %cst_34 : f32 to vector<1x128xf32>
    %306 = arith.mulf %305, %304 : vector<1x128xf32>
    %307 = math.tanh %306 : vector<1x128xf32>
    %cst_35 = arith.constant 5.000000e-01 : f32
    %308 = vector.broadcast %cst_35 : f32 to vector<1x128xf32>
    %309 = arith.mulf %308, %307 : vector<1x128xf32>
    %cst_36 = arith.constant 5.000000e-01 : f32
    %310 = vector.broadcast %cst_36 : f32 to vector<1x128xf32>
    %311 = arith.addf %309, %310 : vector<1x128xf32>
    %c62 = arith.constant 62 : index
    %312 = memref.load %arg2[%c62] : memref<67xf32, #tpu.memory_space<smem>>
    %313 = vector.broadcast %312 : f32 to vector<1x128xf32>
    %314 = arith.mulf %286, %313 : vector<1x128xf32>
    %c63 = arith.constant 63 : index
    %315 = memref.load %arg2[%c63] : memref<67xf32, #tpu.memory_space<smem>>
    %316 = vector.broadcast %315 : f32 to vector<1x128xf32>
    %317 = arith.mulf %311, %316 : vector<1x128xf32>
    %318 = arith.addf %314, %317 : vector<1x128xf32>
    %c64 = arith.constant 64 : index
    %319 = memref.load %arg2[%c64] : memref<67xf32, #tpu.memory_space<smem>>
    %320 = vector.broadcast %319 : f32 to vector<1x128xf32>
    %321 = arith.addf %318, %320 : vector<1x128xf32>
    %cst_37 = arith.constant 5.000000e-01 : f32
    %322 = vector.broadcast %cst_37 : f32 to vector<1x128xf32>
    %323 = arith.mulf %322, %321 : vector<1x128xf32>
    %324 = math.tanh %323 : vector<1x128xf32>
    %cst_38 = arith.constant 5.000000e-01 : f32
    %325 = vector.broadcast %cst_38 : f32 to vector<1x128xf32>
    %326 = arith.mulf %325, %324 : vector<1x128xf32>
    %cst_39 = arith.constant 5.000000e-01 : f32
    %327 = vector.broadcast %cst_39 : f32 to vector<1x128xf32>
    %328 = arith.addf %326, %327 : vector<1x128xf32>
    %c65 = arith.constant 65 : index
    %329 = memref.load %arg2[%c65] : memref<67xf32, #tpu.memory_space<smem>>
    %330 = vector.broadcast %329 : f32 to vector<1x128xf32>
    %331 = arith.mulf %328, %330 : vector<1x128xf32>
    %c66 = arith.constant 66 : index
    %332 = memref.load %arg2[%c66] : memref<67xf32, #tpu.memory_space<smem>>
    %333 = vector.broadcast %332 : f32 to vector<1x128xf32>
    %334 = arith.addf %331, %333 : vector<1x128xf32>
    %cst_40 = arith.constant 5.000000e-01 : f32
    %335 = vector.broadcast %cst_40 : f32 to vector<1x128xf32>
    %336 = arith.mulf %335, %334 : vector<1x128xf32>
    %337 = math.tanh %336 : vector<1x128xf32>
    %cst_41 = arith.constant 5.000000e-01 : f32
    %338 = vector.broadcast %cst_41 : f32 to vector<1x128xf32>
    %339 = arith.mulf %338, %337 : vector<1x128xf32>
    %cst_42 = arith.constant 5.000000e-01 : f32
    %340 = vector.broadcast %cst_42 : f32 to vector<1x128xf32>
    %341 = arith.addf %339, %340 : vector<1x128xf32>
    %c0_43 = arith.constant 0 : index
    %c0_44 = arith.constant 0 : index
    %342 = vector.load %arg3[%c0_43, %c0_44] : memref<1x128xf32, #tpu.memory_space<vmem>>, vector<1x128xf32>
    tpu.vector_store %arg3[%c0_43, %c0_44], %341 {strides = array<i32>} : memref<1x128xf32, #tpu.memory_space<vmem>>, vector<1x128xf32>,
    return
  }
  func.func @transform_0(%arg0: i32) -> (i32, i32) {
    %c0_i32 = arith.constant 0 : i32
    %c0_i32_0 = arith.constant 0 : i32
    return %c0_i32, %arg0 : i32, i32
  }
  func.func @transform_1(%arg0: i32) -> i32 {
    %c0_i32 = arith.constant 0 : i32
    %c0_i32_0 = arith.constant 0 : i32
    return %c0_i32 : i32
  }
  func.func @transform_2(%arg0: i32) -> (i32, i32) {
    %c0_i32 = arith.constant 0 : i32
    %c0_i32_0 = arith.constant 0 : i32
    return %c0_i32, %arg0 : i32, i32
  }
}

</mosaic_0001>

<llo_original>
// kernel: tpu_custom_call.1
$region0: #{tpu_custom_call.1}
  #allocation0 [shape = 'u32[]', space=smem, size = 0x4, offset = 0x4, fixed_abs, tag = 'smem constant byte address 0x4 - core index']
  #allocation1 [shape = 'u32[144,128]{1,0:T(1,128)}', space=vmem, size = 0x12000, scoped, tag = 'internal scratch']
  %s0 = inlined_call_operand.hbm [shape: f32[3,128], index: 0, kind: input, shape index: {}]
  %s1 = inlined_call_operand.vmem [shape: f32[67], index: 1, kind: input, shape index: {}]
  %s2 = inlined_call_operand.hbm [shape: f32[1,128], index: 2, kind: output, shape index: {}]
  %s3 = sld [smem:[#allocation0]]
  $region26: #{tpu_custom_call.1} parent=0
    _
  %s5 = ssub.s32 1, %s3
  %s6 = scalar_select 0, %s5, %s3
  $region1: #{tpu_custom_call.1} parent=0
    #allocation2 [shape = 'u8[2048]{0}', space=vmem, size = 0x800, scoped, tag = 'input window, operand 0, single buffered']
    #allocation3 [shape = 's32[1]{0}', space=sflag, size = 0x4, scoped, tag = 'scoped memory for tpu_custom_call.1']
    #allocation4 [shape = 's32[1]{0}', space=sflag, size = 0x4, scoped, tag = 'scoped memory for tpu_custom_call.1']
    #allocation5 [shape = 's32[1]{0}', space=sflag, size = 0x4, scoped, tag = 'scoped memory for tpu_custom_call.1']
    #allocation6 [shape = 'u8[512]{0}', space=smem, size = 0x200, scoped, tag = 'input window, operand 1, single buffered']
    #allocation7 [shape = 'u8[512]{0}', space=vmem, size = 0x400, scoped, tag = 'output window, operand 0, single buffered']
    %7 = vsyncpa [#allocation3], 0
    %8 = vsyncpa [#allocation5], 0
    %9 = vsyncpa [#allocation4], 0
    // Predicated region
    $region2: #{tpu_custom_call.1} parent=1 // pred_check
      _
    $region3: #{tpu_custom_call.1} parent=1 // pred_check_branch
      %11 = sbr.rel (0) target = $region5
    $region4: #{tpu_custom_call.1} parent=1 // pred_region
      %s13 = ssub.s32 64, 64
      %14 = vsyncadd [#allocation3], %s13
      %s16 = sshll.u32 [#allocation2], 4
      %s17 = int_to_ptr.vmem [resolvable:$true] %s16
      %19 = dma.hbm_to_vmem [thread:$0]  %s0, 64, %s17, [#allocation3]
    $region5: #{tpu_custom_call.1} parent=1 // pred_fallthru
      _
    // Predicated region
    $region6: #{tpu_custom_call.1} parent=1 // pred_check
      _
    $region7: #{tpu_custom_call.1} parent=1 // pred_check_branch
      %21 = sbr.rel (0) target = $region9
    $region8: #{tpu_custom_call.1} parent=1 // pred_region
      %s23 = ssub.s32 16, 16
      %24 = vsyncadd [#allocation5], %s23
      %s26 = sshll.u32 %s1, 4
      %s27 = int_to_ptr.vmem [resolvable:$true] %s26
      %29 = dma.vmem_to_smem %s27, 16, [#allocation6], [#allocation5]
    $region9: #{tpu_custom_call.1} parent=1 // pred_fallthru
      _
    // Predicated region
    $region10: #{tpu_custom_call.1} parent=1 // pred_check
      _
    $region11: #{tpu_custom_call.1} parent=1 // pred_check_branch
      %31 = sbr.rel (0) target = $region13
    $region12: #{tpu_custom_call.1} parent=1 // pred_region
      %32 = dma.done [#allocation3], 64
    $region13: #{tpu_custom_call.1} parent=1 // pred_fallthru
      _
    // Predicated region
    $region14: #{tpu_custom_call.1} parent=1 // pred_check
      _
    $region15: #{tpu_custom_call.1} parent=1 // pred_check_branch
      %34 = sbr.rel (0) target = $region17
    $region16: #{tpu_custom_call.1} parent=1 // pred_region
      %35 = dma.done [#allocation5], 16
    $region17: #{tpu_custom_call.1} parent=1 // pred_fallthru
      _
    %36 = sfence
    %v37 = vld [vmem:[#allocation2] sm:$0x7]
    %s38 = sld [smem:[#allocation6]]
    %v39 = vstv %s38
    %v40 = vmul.f32 %v37, %v39
    %s41 = sld [smem:[#allocation6 + $0x1]]
    %v42 = vstv %s41
    %v43 = vmul.f32 %v37, %v42
    %v45 = vrot.slane %v43, 1
    %v47 = vadd.f32 %v40, %v45
    %s48 = sld [smem:[#allocation6 + $0x2]]
    %v49 = vstv %s48
    %v50 = vmul.f32 %v37, %v49
    %v52 = vrot.slane %v50, 2
    %v54 = vadd.f32 %v47, %v52
    %s55 = sld [smem:[#allocation6 + $0x12]]
    %v56 = vstv %s55
    %v57 = vadd.f32 %v54, %v56
    %v58 = vmul.f32 %v57, 0.5
    %v59 = vtanh.pop %v58
    %v60 = vmul.f32 %v59, 0.5
    %v61 = vadd.f32 %v60, 0.5
    %s62 = sld [smem:[#allocation6 + $0x3]]
    %v63 = vstv %s62
    %v64 = vmul.f32 %v37, %v63
    %s65 = sld [smem:[#allocation6 + $0x4]]
    %v66 = vstv %s65
    %v67 = vmul.f32 %v37, %v66
    %v69 = vrot.slane %v67, 1
    %v71 = vadd.f32 %v64, %v69
    %s72 = sld [smem:[#allocation6 + $0x5]]
    %v73 = vstv %s72
    %v74 = vmul.f32 %v37, %v73
    %v76 = vrot.slane %v74, 2
    %v78 = vadd.f32 %v71, %v76
    %s79 = sld [smem:[#allocation6 + $0x13]]
    %v80 = vstv %s79
    %v81 = vadd.f32 %v78, %v80
    %v82 = vmul.f32 %v81, 0.5
    %v83 = vtanh.pop %v82
    %v84 = vmul.f32 %v83, 0.5
    %v85 = vadd.f32 %v84, 0.5
    %s86 = sld [smem:[#allocation6 + $0x6]]
    %v87 = vstv %s86
    %v88 = vmul.f32 %v37, %v87
    %s89 = sld [smem:[#allocation6 + $0x7]]
    %v90 = vstv %s89
    %v91 = vmul.f32 %v37, %v90
    %v93 = vrot.slane %v91, 1
    %v95 = vadd.f32 %v88, %v93
    %s96 = sld [smem:[#allocation6 + $0x8]]
    %v97 = vstv %s96
    %v98 = vmul.f32 %v37, %v97
    %v100 = vrot.slane %v98, 2
    %v102 = vadd.f32 %v95, %v100
    %s103 = sld [smem:[#allocation6 + $0x14]]
    %v104 = vstv %s103
    %v105 = vadd.f32 %v102, %v104
    %v106 = vmul.f32 %v105, 0.5
    %v107 = vtanh.pop %v106
    %v108 = vmul.f32 %v107, 0.5
    %v109 = vadd.f32 %v108, 0.5
    %s110 = sld [smem:[#allocation6 + $0x9]]
    %v111 = vstv %s110
    %v112 = vmul.f32 %v37, %v111
    %s113 = sld [smem:[#allocation6 + $0xa]]
    %v114 = vstv %s113
    %v115 = vmul.f32 %v37, %v114
    %v117 = vrot.slane %v115, 1
    %v119 = vadd.f32 %v112, %v117
    %s120 = sld [smem:[#allocation6 + $0xb]]
    %v121 = vstv %s120
    %v122 = vmul.f32 %v37, %v121
    %v124 = vrot.slane %v122, 2
    %v126 = vadd.f32 %v119, %v124
    %s127 = sld [smem:[#allocation6 + $0x15]]
    %v128 = vstv %s127
    %v129 = vadd.f32 %v126, %v128
    %v130 = vmul.f32 %v129, 0.5
    %v131 = vtanh.pop %v130
    %v132 = vmul.f32 %v131, 0.5
    %v133 = vadd.f32 %v132, 0.5
    %s134 = sld [smem:[#allocation6 + $0xc]]
    %v135 = vstv %s134
    %v136 = vmul.f32 %v37, %v135
    %s137 = sld [smem:[#allocation6 + $0xd]]
    %v138 = vstv %s137
    %v139 = vmul.f32 %v37, %v138
    %v141 = vrot.slane %v139, 1
    %v143 = vadd.f32 %v136, %v141
    %s144 = sld [smem:[#allocation6 + $0xe]]
    %v145 = vstv %s144
    %v146 = vmul.f32 %v37, %v145
    %v148 = vrot.slane %v146, 2
    %v150 = vadd.f32 %v143, %v148
    %s151 = sld [smem:[#allocation6 + $0x16]]
    %v152 = vstv %s151
    %v153 = vadd.f32 %v150, %v152
    %v154 = vmul.f32 %v153, 0.5
    %v155 = vtanh.pop %v154
    %v156 = vmul.f32 %v155, 0.5
    %v157 = vadd.f32 %v156, 0.5
    %s158 = sld [smem:[#allocation6 + $0xf]]
    %v159 = vstv %s158
    %v160 = vmul.f32 %v37, %v159
    %s161 = sld [smem:[#allocation6 + $0x10]]
    %v162 = vstv %s161
    %v163 = vmul.f32 %v37, %v162
    %v165 = vrot.slane %v163, 1
    %v167 = vadd.f32 %v160, %v165
    %s168 = sld [smem:[#allocation6 + $0x11]]
    %v169 = vstv %s168
    %v170 = vmul.f32 %v37, %v169
    %v172 = vrot.slane %v170, 2
    %v174 = vadd.f32 %v167, %v172
    %s175 = sld [smem:[#allocation6 + $0x17]]
    %v176 = vstv %s175
    %v177 = vadd.f32 %v174, %v176
    %v178 = vmul.f32 %v177, 0.5
    %v179 = vtanh.pop %v178
    %v180 = vmul.f32 %v179, 0.5
    %v181 = vadd.f32 %v180, 0.5
    %s182 = sld [smem:[#allocation6 + $0x18]]
    %v183 = vstv %s182
    %v184 = vmul.f32 %v61, %v183
    %s185 = sld [smem:[#allocation6 + $0x19]]
    %v186 = vstv %s185
    %v187 = vmul.f32 %v85, %v186
    %v188 = vadd.f32 %v184, %v187
    %s189 = sld [smem:[#allocation6 + $0x1a]]
    %v190 = vstv %s189
    %v191 = vmul.f32 %v109, %v190
    %v192 = vadd.f32 %v188, %v191
    %s193 = sld [smem:[#allocation6 + $0x1b]]
    %v194 = vstv %s193
    %v195 = vmul.f32 %v133, %v194
    %v196 = vadd.f32 %v192, %v195
    %s197 = sld [smem:[#allocation6 + $0x1c]]
    %v198 = vstv %s197
    %v199 = vmul.f32 %v157, %v198
    %v200 = vadd.f32 %v196, %v199
    %s201 = sld [smem:[#allocation6 + $0x1d]]
    %v202 = vstv %s201
    %v203 = vmul.f32 %v181, %v202
    %v204 = vadd.f32 %v200, %v203
    %s205 = sld [smem:[#allocation6 + $0x30]]
    %v206 = vstv %s205
    %v207 = vadd.f32 %v204, %v206
    %v208 = vmul.f32 %v207, 0.5
    %v209 = vtanh.pop %v208
    %v210 = vmul.f32 %v209, 0.5
    %v211 = vadd.f32 %v210, 0.5
    %s212 = sld [smem:[#allocation6 + $0x1e]]
    %v213 = vstv %s212
    %v214 = vmul.f32 %v61, %v213
    %s215 = sld [smem:[#allocation6 + $0x1f]]
    %v216 = vstv %s215
    %v217 = vmul.f32 %v85, %v216
    %v218 = vadd.f32 %v214, %v217
    %s219 = sld [smem:[#allocation6 + $0x20]]
    %v220 = vstv %s219
    %v221 = vmul.f32 %v109, %v220
    %v222 = vadd.f32 %v218, %v221
    %s223 = sld [smem:[#allocation6 + $0x21]]
    %v224 = vstv %s223
    %v225 = vmul.f32 %v133, %v224
    %v226 = vadd.f32 %v222, %v225
    %s227 = sld [smem:[#allocation6 + $0x22]]
    %v228 = vstv %s227
    %v229 = vmul.f32 %v157, %v228
    %v230 = vadd.f32 %v226, %v229
    %s231 = sld [smem:[#allocation6 + $0x23]]
    %v232 = vstv %s231
    %v233 = vmul.f32 %v181, %v232
    %v234 = vadd.f32 %v230, %v233
    %s235 = sld [smem:[#allocation6 + $0x31]]
    %v236 = vstv %s235
    %v237 = vadd.f32 %v234, %v236
    %v238 = vmul.f32 %v237, 0.5
    %v239 = vtanh.pop %v238
    %v240 = vmul.f32 %v239, 0.5
    %v241 = vadd.f32 %v240, 0.5
    %s242 = sld [smem:[#allocation6 + $0x24]]
    %v243 = vstv %s242
    %v244 = vmul.f32 %v61, %v243
    %s245 = sld [smem:[#allocation6 + $0x25]]
    %v246 = vstv %s245
    %v247 = vmul.f32 %v85, %v246
    %v248 = vadd.f32 %v244, %v247
    %s249 = sld [smem:[#allocation6 + $0x26]]
    %v250 = vstv %s249
    %v251 = vmul.f32 %v109, %v250
    %v252 = vadd.f32 %v248, %v251
    %s253 = sld [smem:[#allocation6 + $0x27]]
    %v254 = vstv %s253
    %v255 = vmul.f32 %v133, %v254
    %v256 = vadd.f32 %v252, %v255
    %s257 = sld [smem:[#allocation6 + $0x28]]
    %v258 = vstv %s257
    %v259 = vmul.f32 %v157, %v258
    %v260 = vadd.f32 %v256, %v259
    %s261 = sld [smem:[#allocation6 + $0x29]]
    %v262 = vstv %s261
    %v263 = vmul.f32 %v181, %v262
    %v264 = vadd.f32 %v260, %v263
    %s265 = sld [smem:[#allocation6 + $0x32]]
    %v266 = vstv %s265
    %v267 = vadd.f32 %v264, %v266
    %v268 = vmul.f32 %v267, 0.5
    %v269 = vtanh.pop %v268
    %v270 = vmul.f32 %v269, 0.5
    %v271 = vadd.f32 %v270, 0.5
    %s272 = sld [smem:[#allocation6 + $0x2a]]
    %v273 = vstv %s272
    %v274 = vmul.f32 %v61, %v273
    %s275 = sld [smem:[#allocation6 + $0x2b]]
    %v276 = vstv %s275
    %v277 = vmul.f32 %v85, %v276
    %v278 = vadd.f32 %v274, %v277
    %s279 = sld [smem:[#allocation6 + $0x2c]]
    %v280 = vstv %s279
    %v281 = vmul.f32 %v109, %v280
    %v282 = vadd.f32 %v278, %v281
    %s283 = sld [smem:[#allocation6 + $0x2d]]
    %v284 = vstv %s283
    %v285 = vmul.f32 %v133, %v284
    %v286 = vadd.f32 %v282, %v285
    %s287 = sld [smem:[#allocation6 + $0x2e]]
    %v288 = vstv %s287
    %v289 = vmul.f32 %v157, %v288
    %v290 = vadd.f32 %v286, %v289
    %s291 = sld [smem:[#allocation6 + $0x2f]]
    %v292 = vstv %s291
    %v293 = vmul.f32 %v181, %v292
    %v294 = vadd.f32 %v290, %v293
    %s295 = sld [smem:[#allocation6 + $0x33]]
    %v296 = vstv %s295
    %v297 = vadd.f32 %v294, %v296
    %v298 = vmul.f32 %v297, 0.5
    %v299 = vtanh.pop %v298
    %v300 = vmul.f32 %v299, 0.5
    %v301 = vadd.f32 %v300, 0.5
    %s302 = sld [smem:[#allocation6 + $0x34]]
    %v303 = vstv %s302
    %v304 = vmul.f32 %v211, %v303
    %s305 = sld [smem:[#allocation6 + $0x35]]
    %v306 = vstv %s305
    %v307 = vmul.f32 %v241, %v306
    %v308 = vadd.f32 %v304, %v307
    %s309 = sld [smem:[#allocation6 + $0x36]]
    %v310 = vstv %s309
    %v311 = vmul.f32 %v271, %v310
    %v312 = vadd.f32 %v308, %v311
    %s313 = sld [smem:[#allocation6 + $0x37]]
    %v314 = vstv %s313
    %v315 = vmul.f32 %v301, %v314
    %v316 = vadd.f32 %v312, %v315
    %s317 = sld [smem:[#allocation6 + $0x3c]]
    %v318 = vstv %s317
    %v319 = vadd.f32 %v316, %v318
    %v320 = vmul.f32 %v319, 0.5
    %v321 = vtanh.pop %v320
    %v322 = vmul.f32 %v321, 0.5
    %v323 = vadd.f32 %v322, 0.5
    %s324 = sld [smem:[#allocation6 + $0x38]]
    %v325 = vstv %s324
    %v326 = vmul.f32 %v211, %v325
    %s327 = sld [smem:[#allocation6 + $0x39]]
    %v328 = vstv %s327
    %v329 = vmul.f32 %v241, %v328
    %v330 = vadd.f32 %v326, %v329
    %s331 = sld [smem:[#allocation6 + $0x3a]]
    %v332 = vstv %s331
    %v333 = vmul.f32 %v271, %v332
    %v334 = vadd.f32 %v330, %v333
    %s335 = sld [smem:[#allocation6 + $0x3b]]
    %v336 = vstv %s335
    %v337 = vmul.f32 %v301, %v336
    %v338 = vadd.f32 %v334, %v337
    %s339 = sld [smem:[#allocation6 + $0x3d]]
    %v340 = vstv %s339
    %v341 = vadd.f32 %v338, %v340
    %v342 = vmul.f32 %v341, 0.5
    %v343 = vtanh.pop %v342
    %v344 = vmul.f32 %v343, 0.5
    %v345 = vadd.f32 %v344, 0.5
    %s346 = sld [smem:[#allocation6 + $0x3e]]
    %v347 = vstv %s346
    %v348 = vmul.f32 %v323, %v347
    %s349 = sld [smem:[#allocation6 + $0x3f]]
    %v350 = vstv %s349
    %v351 = vmul.f32 %v345, %v350
    %v352 = vadd.f32 %v348, %v351
    %s353 = sld [smem:[#allocation6 + $0x40]]
    %v354 = vstv %s353
    %v355 = vadd.f32 %v352, %v354
    %v356 = vmul.f32 %v355, 0.5
    %v357 = vtanh.pop %v356
    %v358 = vmul.f32 %v357, 0.5
    %v359 = vadd.f32 %v358, 0.5
    %s360 = sld [smem:[#allocation6 + $0x41]]
    %v361 = vstv %s360
    %v362 = vmul.f32 %v359, %v361
    %s363 = sld [smem:[#allocation6 + $0x42]]
    %v364 = vstv %s363
    %v365 = vadd.f32 %v362, %v364
    %v366 = vmul.f32 %v365, 0.5
    %v367 = vtanh.pop %v366
    %v368 = vmul.f32 %v367, 0.5
    %v369 = vadd.f32 %v368, 0.5
    %370 = vst [vmem:[#allocation7] sm:$0x1] %v369
    // Predicated region
    $region18: #{tpu_custom_call.1} parent=1 // pred_check
      _
    $region19: #{tpu_custom_call.1} parent=1 // pred_check_branch
      %372 = sbr.rel (0) target = $region21
    $region20: #{tpu_custom_call.1} parent=1 // pred_region
      %s374 = ssub.s32 16, 16
      %375 = vsyncadd [#allocation4], %s374
      %s377 = sshll.u32 [#allocation7], 4
      %s378 = int_to_ptr.vmem [resolvable:$true] %s377
      %380 = dma.vmem_to_hbm [thread:$0]  %s378, 16, %s2, [#allocation4]
    $region21: #{tpu_custom_call.1} parent=1 // pred_fallthru
      _
    // Predicated region
    $region22: #{tpu_custom_call.1} parent=1 // pred_check
      _
    $region23: #{tpu_custom_call.1} parent=1 // pred_check_branch
      %382 = sbr.rel (0) target = $region25
    $region24: #{tpu_custom_call.1} parent=1 // pred_region
      %383 = dma.done [#allocation4], 16
    $region25: #{tpu_custom_call.1} parent=1 // pred_fallthru
      _
    %384 = vsyncpa [#allocation3], 1
    %385 = vsyncpa [#allocation4], 1
    %386 = vsyncpa [#allocation5], 1

</llo_original>
